<compile_context>
chip_gen: v7x
topology: tpu7x:2x2x1
jax: 0.10.0
libtpu: 0.0.40
codegen_flags: <defaults>
</compile_context>

<pallas_src>
import jax
import jax.numpy as jnp
from jax.experimental import pallas as pl
from jax.experimental.pallas import tpu as pltpu


def gcn_fused_kernel(xw1_ref, a_ref, pa_ref,
                     b1_ref, w2_ref, b2_ref, w3l_ref, bp_ref,
                     out_ref, p1_ref, h2_ref):
    layer = pl.program_id(0)
    blk = pl.program_id(1)
    tm = a_ref.shape[0]
    row = pl.multiple_of(blk * tm, tm)

    a_blk = a_ref[...]                       # [TM, N] bf16 rows of A_hat

    # ---- pass 0: h1 = relu(A_blk @ (X W1) + b1);  store p1 = h1 @ W2 --------
    @pl.when(layer == 0)
    def _conv1():
        h = jnp.dot(a_blk, xw1_ref[...],
                    preferred_element_type=jnp.float32) + b1_ref[...]
        h1 = jnp.maximum(h, 0.0).astype(jnp.bfloat16)
        p1_ref[pl.ds(row, tm), :] = jnp.dot(
            h1, w2_ref[...], preferred_element_type=jnp.float32
        ).astype(p1_ref.dtype)

    # ---- pass 1: h2 = relu(A_blk @ p1 + b2) ----------------------------------
    @pl.when(layer == 1)
    def _conv2():
        h = jnp.dot(a_blk, p1_ref[...],
                    preferred_element_type=jnp.float32) + b2_ref[...]
        h2_ref[pl.ds(row, tm), :] = jnp.maximum(h, 0.0).astype(h2_ref.dtype)

    # ---- finalize: out = (pool @ A_hat @ h2) @ (W3 Wl) + (b3 Wl + bl) --------
    # conv3's A_hat aggregation is carried by PA = pool @ A_hat (wrapper fold);
    # F.dropout(p=0.5, training=False) is identity in eval mode.
    # TODO(synk): training-mode dropout is intentionally not implemented.
    @pl.when(jnp.logical_and(layer == pl.num_programs(0) - 1,
                             blk == pl.num_programs(1) - 1))
    def _finalize():
        pooled = jnp.dot(pa_ref[...], h2_ref[...],
                         preferred_element_type=jnp.float32)          # [G, hp]
        out_ref[...] = (jnp.dot(pooled.astype(jnp.bfloat16), w3l_ref[...],
                                preferred_element_type=jnp.float32)
                        + bp_ref[...]).astype(out_ref.dtype)


def _round_up(v, m):
    return ((v + m - 1) // m) * m


def _pad2(arr, rows, cols, dtype=None):
    r, c = arr.shape
    out = jnp.pad(arr, ((0, rows - r), (0, cols - c)))
    return out.astype(dtype) if dtype is not None else out


def _device_vmem_bytes():
    try:
        return int(pltpu.get_tpu_info().vmem_capacity_bytes)
    except Exception:
        return 64 * 1024 * 1024   # conservative: v7x per-TensorCore VMEM


def gcn_forward(x, a_hat, params, pool_mat):
    """Fused eval-mode GCN forward.  x: [N, F], a_hat: [N, N], pool_mat: [G, N]."""
    w1, b1, w2, b2, w3, b3, wl, bl = params
    n, _ = x.shape
    hidden = w1.shape[1]
    num_classes = wl.shape[1]
    g = pool_mat.shape[0]

    bf16 = jnp.bfloat16
    hp = _round_up(hidden, 128)          # lane-dense hidden dim
    cp = _round_up(num_classes, 128)     # lane-dense class dim
    gp = _round_up(g, 16)                # sublane-clean graph dim

    # ---- wrapper-side algebraic folds (valid because eval dropout == id) -----
    xw1 = x @ w1                         # [N, hidden]   tiny XLA matmul
    w3l = w3 @ wl                        # [hidden, classes]
    b_fold = b3 @ wl + bl                # [1, classes]
    # TODO(synk): bias fold assumes every graph is non-empty (mean-pool rows
    # sum to 1); an all-zero pool row would not pick up the b3 term.
    pa = pool_mat @ a_hat                # [G, N]  conv3's aggregation folded in

    # ---- tiling: derive A row-block size from a per-generation VMEM budget ---
    vmem_cap = _device_vmem_bytes()
    budget = int(0.6 * vmem_cap)

    def _bytes_needed(tm, n_pad):
        a_buf = 2 * tm * n_pad * 2                    # A row block, 2 buffers
        resident = (2 * n_pad * hp * 2                # X @ W1 (2 buffers)
                    + 2 * gp * n_pad * 2              # pool @ A_hat
                    + 2 * n_pad * hp * 2              # p1 + h2 VMEM scratch
                    + 2 * (hp * hp + hp * cp) * 2     # W2, W3 @ Wl
                    + 2 * (2 * hp + cp) * 4           # biases
                    + 2 * gp * cp * 4)                # output block
        return a_buf + resident

    n128 = _round_up(n, 128)
    if _bytes_needed(n128, n128) <= budget:
        tm, n_pad = n128, n128           # small-N fast path: 2 grid steps total
    else:
        tm, n_pad = 128, n128            # fallback (largest streamed tile below)
        for cand in (1024, 512, 256, 128):
            npad_c = _round_up(n, cand)
            if _bytes_needed(cand, npad_c) <= budget:
                tm, n_pad = cand, npad_c
                break
    n_blocks = n_pad // tm

    # ---- pad + cast (bf16 MXU operands, f32 biases / accumulation) -----------
    xw1_p = _pad2(xw1, n_pad, hp, bf16)
    a_p = _pad2(a_hat, n_pad, n_pad, bf16)
    pa_p = _pad2(pa, gp, n_pad, bf16)
    w2_p = _pad2(w2, hp, hp, bf16)
    w3l_p = _pad2(w3l, hp, cp, bf16)
    b1_p = _pad2(b1, 1, hp, jnp.float32)
    b2_p = _pad2(b2, 1, hp, jnp.float32)
    bp_p = _pad2(b_fold, 1, cp, jnp.float32)

    flops = (2 * n_pad * n_pad * hp          # layer 0 aggregation
             + 2 * n_pad * hp * hp           # p1 = h1 @ W2
             + 2 * n_pad * n_pad * hp        # layer 1 aggregation
             + 2 * gp * n_pad * hp           # pooled = PA @ h2
             + 2 * gp * hp * cp)             # pooled @ (W3 Wl)
    bytes_accessed = (2 * n_pad * n_pad * 2            # A streamed per layer
                      + n_pad * hp * 2 + gp * n_pad * 2
                      + (hp * hp + hp * cp) * 2
                      + (2 * hp + cp) * 4 + gp * cp * 4)

    vmem_limit = int(min(0.9 * vmem_cap,
                         max(32 * 1024 * 1024,
                             _bytes_needed(tm, n_pad) + 16 * 1024 * 1024)))

    const = lambda l, j: (0, 0)
    out_p = pl.pallas_call(
        gcn_fused_kernel,
        out_shape=jax.ShapeDtypeStruct((gp, cp), jnp.float32),
        grid_spec=pltpu.PrefetchScalarGridSpec(
            num_scalar_prefetch=0,
            grid=(2, n_blocks),                          # (layer, A row block)
            in_specs=[
                pl.BlockSpec((n_pad, hp), const),                 # X @ W1
                pl.BlockSpec((tm, n_pad), lambda l, j: (j, 0)),   # A_hat rows
                pl.BlockSpec((gp, n_pad), const),                 # pool @ A_hat
                pl.BlockSpec((1, hp), const),                     # b1
                pl.BlockSpec((hp, hp), const),                    # W2
                pl.BlockSpec((1, hp), const),                     # b2
                pl.BlockSpec((hp, cp), const),                    # W3 @ Wl
                pl.BlockSpec((1, cp), const),                     # b3 Wl + bl
            ],
            out_specs=pl.BlockSpec((gp, cp), const),
            scratch_shapes=[
                pltpu.VMEM((n_pad, hp), bf16),   # p1 = relu(conv1) @ W2
                pltpu.VMEM((n_pad, hp), bf16),   # h2 = relu(conv2)
            ]),
        compiler_params=pltpu.CompilerParams(
            # Layer 1 aggregates over ALL rows of layer 0 through the resident
            # scratch, so both grid axes must stay sequential on one core.
            dimension_semantics=("arbitrary", "arbitrary"),
            vmem_limit_bytes=vmem_limit),
        cost_estimate=pl.CostEstimate(flops=flops, transcendentals=0,
                                      bytes_accessed=bytes_accessed),
    )(xw1_p, a_p, pa_p, b1_p, w2_p, b2_p, w3l_p, bp_p)

    return out_p[:g, :num_classes]


def build_normalized_adj(edge_index, num_nodes):
    """Dense D^-1/2 (A + I) D^-1/2 (GCNConv default normalization)."""
    src, dst = edge_index[0], edge_index[1]
    a = jnp.zeros((num_nodes, num_nodes), jnp.float32)
    a = a.at[src, dst].set(1.0)
    a = jnp.maximum(a, a.T)                              # undirected graph
    a = a + jnp.eye(num_nodes, dtype=jnp.float32)        # self-loops
    deg = a.sum(axis=1)
    d_inv_sqrt = jnp.where(deg > 0, 1.0 / jnp.sqrt(deg), 0.0)
    return a * d_inv_sqrt[:, None] * d_inv_sqrt[None, :]


def build_pool_matrix(batch, num_graphs):
    """[num_graphs, N] matrix implementing global_mean_pool as a matmul."""
    onehot = (batch[None, :] == jnp.arange(num_graphs)[:, None]).astype(jnp.float32)
    counts = onehot.sum(axis=1, keepdims=True)
    return onehot / jnp.maximum(counts, 1.0)


if __name__ == "__main__":
    # Shapes consistent with the module: num_node_features = 33 (csv cols 2:35),
    # hidden_channels = 32, num_classes = 2.
    N = 64
    F_IN = 33
    HIDDEN = 32
    NUM_CLASSES = 2
    NUM_GRAPHS = 4
    NUM_EDGES = 128

    key = jax.random.PRNGKey(0)
    (k_x, k_e, k1, k2, k3, k4, k5, k6, k7, k8) = jax.random.split(key, 10)

    x = jax.random.normal(k_x, (N, F_IN), dtype=jnp.float32)
    edge_index = jax.random.randint(k_e, (2, NUM_EDGES), 0, N, dtype=jnp.int32)
    a_hat = build_normalized_adj(edge_index, N)

    batch = jnp.repeat(jnp.arange(NUM_GRAPHS, dtype=jnp.int32), N // NUM_GRAPHS)
    pool_mat = build_pool_matrix(batch, NUM_GRAPHS)

    def init_w(k, shape):
        fan_in = shape[0]
        return (jax.random.normal(k, shape, dtype=jnp.float32)
                / jnp.sqrt(jnp.float32(fan_in)))

    w1 = init_w(k1, (F_IN, HIDDEN))
    w2 = init_w(k2, (HIDDEN, HIDDEN))
    w3 = init_w(k3, (HIDDEN, HIDDEN))
    wl = init_w(k4, (HIDDEN, NUM_CLASSES))
    b1 = 0.1 * jax.random.normal(k5, (1, HIDDEN), dtype=jnp.float32)
    b2 = 0.1 * jax.random.normal(k6, (1, HIDDEN), dtype=jnp.float32)
    b3 = 0.1 * jax.random.normal(k7, (1, HIDDEN), dtype=jnp.float32)
    bl = 0.1 * jax.random.normal(k8, (1, NUM_CLASSES), dtype=jnp.float32)

    params = (w1, b1, w2, b2, w3, b3, wl, bl)

    out = gcn_forward(x, a_hat, params, pool_mat)
    out = jax.block_until_ready(out)

    # pure-f32 reference of the original (un-fused, un-padded) forward pass
    h = jnp.maximum(a_hat @ (x @ w1) + b1, 0.0)
    h = jnp.maximum(a_hat @ (h @ w2) + b2, 0.0)
    h = a_hat @ (h @ w3) + b3
    ref = (pool_mat @ h) @ wl + bl

    assert out.shape == (NUM_GRAPHS, NUM_CLASSES)
    max_err = float(jnp.max(jnp.abs(out - ref)))
    # bf16 MXU operands with f32 accumulation; the fold itself is exact, so the
    # tolerance only needs to cover bf16 quantization (tightened vs 5e-2).
    assert jnp.allclose(out, ref, atol=3e-2, rtol=3e-2), f"max_abs_err={max_err}"

    print("KERNEL_OK")
</pallas_src>

<mosaic_0001>
module attributes {stable_mosaic.version = 11 : i64} {
  func.func @gcn_fused_kernel(%arg0: i32, %arg1: i32, %arg2: memref<128x128xbf16, #tpu.memory_space<vmem>>, %arg3: memref<128x128xbf16, #tpu.memory_space<vmem>>, %arg4: memref<16x128xbf16, #tpu.memory_space<vmem>>, %arg5: memref<1x128xf32, #tpu.memory_space<vmem>>, %arg6: memref<128x128xbf16, #tpu.memory_space<vmem>>, %arg7: memref<1x128xf32, #tpu.memory_space<vmem>>, %arg8: memref<128x128xbf16, #tpu.memory_space<vmem>>, %arg9: memref<1x128xf32, #tpu.memory_space<vmem>>, %arg10: memref<16x128xf32, #tpu.memory_space<vmem>>, %arg11: memref<128x128xbf16, #tpu.memory_space<vmem>>, %arg12: memref<128x128xbf16, #tpu.memory_space<vmem>>) attributes {dimension_semantics = [#tpu.dimension_semantics<arbitrary>, #tpu.dimension_semantics<arbitrary>], iteration_bounds = array<i64: 2, 1>, scalar_prefetch = 0 : i64, scratch_operands = 2 : i64, tpu.core_type = #tpu.core_type<tc>, window_params = [{pipeline_mode = #tpu.pipeline_mode<synchronous>, transform_indices = @transform_0, window_bounds = array<i64: 128, 128>}, {transform_indices = @transform_1, window_bounds = array<i64: 128, 128>}, {pipeline_mode = #tpu.pipeline_mode<synchronous>, transform_indices = @transform_2, window_bounds = array<i64: 16, 128>}, {pipeline_mode = #tpu.pipeline_mode<synchronous>, transform_indices = @transform_3, window_bounds = array<i64: 1, 128>}, {pipeline_mode = #tpu.pipeline_mode<synchronous>, transform_indices = @transform_4, window_bounds = array<i64: 128, 128>}, {pipeline_mode = #tpu.pipeline_mode<synchronous>, transform_indices = @transform_5, window_bounds = array<i64: 1, 128>}, {pipeline_mode = #tpu.pipeline_mode<synchronous>, transform_indices = @transform_6, window_bounds = array<i64: 128, 128>}, {pipeline_mode = #tpu.pipeline_mode<synchronous>, transform_indices = @transform_7, window_bounds = array<i64: 1, 128>}, {pipeline_mode = #tpu.pipeline_mode<synchronous>, transform_indices = @transform_8, window_bounds = array<i64: 16, 128>}]} {
    %c128_i32 = arith.constant 128 : i32
    %0 = arith.muli %arg1, %c128_i32 : i32
    %1 = tpu.assume_multiple %0, 128 : i32
    %c0 = arith.constant 0 : index
    %c0_0 = arith.constant 0 : index
    %2 = vector.load %arg3[%c0, %c0_0] : memref<128x128xbf16, #tpu.memory_space<vmem>>, vector<128x128xbf16>
    %c0_i32 = arith.constant 0 : i32
    %3 = arith.cmpi eq, %arg0, %c0_i32 : i32
    %4 = arith.extui %3 : i1 to i32
    %c0_i32_1 = arith.constant 0 : i32
    %5 = arith.cmpi ne, %4, %c0_i32_1 : i32
    scf.if %5 {
      %c0_6 = arith.constant 0 : index
      %c0_7 = arith.constant 0 : index
      %14 = vector.load %arg2[%c0_6, %c0_7] : memref<128x128xbf16, #tpu.memory_space<vmem>>, vector<128x128xbf16>
      %cst = arith.constant dense<0.000000e+00> : vector<128x128xf32>
      %15 = tpu.matmul %2, %14, %cst {dimension_numbers = #tpu.dot_dimension_numbers<[1], [0], [0], [1], [0, 0, 1, 1], [], []>} : vector<128x128xbf16>, vector<128x128xbf16>, vector<128x128xf32> -> vector<128x128xf32>
      %c0_8 = arith.constant 0 : index
      %c0_9 = arith.constant 0 : index
      %16 = vector.load %arg5[%c0_8, %c0_9] : memref<1x128xf32, #tpu.memory_space<vmem>>, vector<1x128xf32>
      %17 = vector.broadcast %16 : vector<1x128xf32> to vector<128x128xf32>
      %18 = arith.addf %15, %17 : vector<128x128xf32>
      %cst_10 = arith.constant 0.000000e+00 : f32
      %19 = vector.broadcast %cst_10 : f32 to vector<128x128xf32>
      %20 = arith.maximumf %18, %19 : vector<128x128xf32>
      %21 = arith.truncf %20 : vector<128x128xf32> to vector<128x128xbf16>
      %c0_11 = arith.constant 0 : index
      %c0_12 = arith.constant 0 : index
      %22 = vector.load %arg6[%c0_11, %c0_12] : memref<128x128xbf16, #tpu.memory_space<vmem>>, vector<128x128xbf16>
      %cst_13 = arith.constant dense<0.000000e+00> : vector<128x128xf32>
      %23 = tpu.matmul %21, %22, %cst_13 {dimension_numbers = #tpu.dot_dimension_numbers<[1], [0], [0], [1], [0, 0, 1, 1], [], []>} : vector<128x128xbf16>, vector<128x128xbf16>, vector<128x128xf32> -> vector<128x128xf32>
      %24 = arith.truncf %23 : vector<128x128xf32> to vector<128x128xbf16>
      %25 = arith.index_cast %1 : i32 to index
      %c0_14 = arith.constant 0 : index
      %26 = vector.load %arg11[%25, %c0_14] : memref<128x128xbf16, #tpu.memory_space<vmem>>, vector<128x128xbf16>
      tpu.vector_store %arg11[%25, %c0_14], %24 {strides = array<i32>} : memref<128x128xbf16, #tpu.memory_space<vmem>>, vector<128x128xbf16>,
    } else {
    }
    %c1_i32 = arith.constant 1 : i32
    %6 = arith.cmpi eq, %arg0, %c1_i32 : i32
    %7 = arith.extui %6 : i1 to i32
    %c0_i32_2 = arith.constant 0 : i32
    %8 = arith.cmpi ne, %7, %c0_i32_2 : i32
    scf.if %8 {
      %c0_6 = arith.constant 0 : index
      %c0_7 = arith.constant 0 : index
      %14 = vector.load %arg11[%c0_6, %c0_7] : memref<128x128xbf16, #tpu.memory_space<vmem>>, vector<128x128xbf16>
      %cst = arith.constant dense<0.000000e+00> : vector<128x128xf32>
      %15 = tpu.matmul %2, %14, %cst {dimension_numbers = #tpu.dot_dimension_numbers<[1], [0], [0], [1], [0, 0, 1, 1], [], []>} : vector<128x128xbf16>, vector<128x128xbf16>, vector<128x128xf32> -> vector<128x128xf32>
      %c0_8 = arith.constant 0 : index
      %c0_9 = arith.constant 0 : index
      %16 = vector.load %arg7[%c0_8, %c0_9] : memref<1x128xf32, #tpu.memory_space<vmem>>, vector<1x128xf32>
      %17 = vector.broadcast %16 : vector<1x128xf32> to vector<128x128xf32>
      %18 = arith.addf %15, %17 : vector<128x128xf32>
      %cst_10 = arith.constant 0.000000e+00 : f32
      %19 = vector.broadcast %cst_10 : f32 to vector<128x128xf32>
      %20 = arith.maximumf %18, %19 : vector<128x128xf32>
      %21 = arith.truncf %20 : vector<128x128xf32> to vector<128x128xbf16>
      %22 = arith.index_cast %1 : i32 to index
      %c0_11 = arith.constant 0 : index
      %23 = vector.load %arg12[%22, %c0_11] : memref<128x128xbf16, #tpu.memory_space<vmem>>, vector<128x128xbf16>
      tpu.vector_store %arg12[%22, %c0_11], %21 {strides = array<i32>} : memref<128x128xbf16, #tpu.memory_space<vmem>>, vector<128x128xbf16>,
    } else {
    }
    %c1_i32_3 = arith.constant 1 : i32
    %9 = arith.cmpi eq, %arg0, %c1_i32_3 : i32
    %c0_i32_4 = arith.constant 0 : i32
    %10 = arith.cmpi eq, %arg1, %c0_i32_4 : i32
    %11 = arith.andi %9, %10 : i1
    %12 = arith.extui %11 : i1 to i32
    %c0_i32_5 = arith.constant 0 : i32
    %13 = arith.cmpi ne, %12, %c0_i32_5 : i32
    scf.if %13 {
      %c0_6 = arith.constant 0 : index
      %c0_7 = arith.constant 0 : index
      %14 = vector.load %arg4[%c0_6, %c0_7] : memref<16x128xbf16, #tpu.memory_space<vmem>>, vector<16x128xbf16>
      %c0_8 = arith.constant 0 : index
      %c0_9 = arith.constant 0 : index
      %15 = vector.load %arg12[%c0_8, %c0_9] : memref<128x128xbf16, #tpu.memory_space<vmem>>, vector<128x128xbf16>
      %cst = arith.constant dense<0.000000e+00> : vector<16x128xf32>
      %16 = tpu.matmul %14, %15, %cst {dimension_numbers = #tpu.dot_dimension_numbers<[1], [0], [0], [1], [0, 0, 1, 1], [], []>} : vector<16x128xbf16>, vector<128x128xbf16>, vector<16x128xf32> -> vector<16x128xf32>
      %17 = arith.truncf %16 : vector<16x128xf32> to vector<16x128xbf16>
      %c0_10 = arith.constant 0 : index
      %c0_11 = arith.constant 0 : index
      %18 = vector.load %arg8[%c0_10, %c0_11] : memref<128x128xbf16, #tpu.memory_space<vmem>>, vector<128x128xbf16>
      %cst_12 = arith.constant dense<0.000000e+00> : vector<16x128xf32>
      %19 = tpu.matmul %17, %18, %cst_12 {dimension_numbers = #tpu.dot_dimension_numbers<[1], [0], [0], [1], [0, 0, 1, 1], [], []>} : vector<16x128xbf16>, vector<128x128xbf16>, vector<16x128xf32> -> vector<16x128xf32>
      %c0_13 = arith.constant 0 : index
      %c0_14 = arith.constant 0 : index
      %20 = vector.load %arg9[%c0_13, %c0_14] : memref<1x128xf32, #tpu.memory_space<vmem>>, vector<1x128xf32>
      %21 = vector.broadcast %20 : vector<1x128xf32> to vector<16x128xf32>
      %22 = arith.addf %19, %21 : vector<16x128xf32>
      %c0_15 = arith.constant 0 : index
      %c0_16 = arith.constant 0 : index
      %23 = vector.load %arg10[%c0_15, %c0_16] : memref<16x128xf32, #tpu.memory_space<vmem>>, vector<16x128xf32>
      tpu.vector_store %arg10[%c0_15, %c0_16], %22 {strides = array<i32>} : memref<16x128xf32, #tpu.memory_space<vmem>>, vector<16x128xf32>,
    } else {
    }
    return
  }
  func.func @transform_0(%arg0: i32, %arg1: i32) -> (i32, i32) {
    %c0_i32 = arith.constant 0 : i32
    %c0_i32_0 = arith.constant 0 : i32
    %c0_i32_1 = arith.constant 0 : i32
    return %c0_i32, %c0_i32_0 : i32, i32
  }
  func.func @transform_1(%arg0: i32, %arg1: i32) -> (i32, i32) {
    %c0_i32 = arith.constant 0 : i32
    %c0_i32_0 = arith.constant 0 : i32
    return %arg1, %c0_i32 : i32, i32
  }
  func.func @transform_2(%arg0: i32, %arg1: i32) -> (i32, i32) {
    %c0_i32 = arith.constant 0 : i32
    %c0_i32_0 = arith.constant 0 : i32
    %c0_i32_1 = arith.constant 0 : i32
    return %c0_i32, %c0_i32_0 : i32, i32
  }
  func.func @transform_3(%arg0: i32, %arg1: i32) -> (i32, i32) {
    %c0_i32 = arith.constant 0 : i32
    %c0_i32_0 = arith.constant 0 : i32
    %c0_i32_1 = arith.constant 0 : i32
    return %c0_i32, %c0_i32_0 : i32, i32
  }
  func.func @transform_4(%arg0: i32, %arg1: i32) -> (i32, i32) {
    %c0_i32 = arith.constant 0 : i32
    %c0_i32_0 = arith.constant 0 : i32
    %c0_i32_1 = arith.constant 0 : i32
    return %c0_i32, %c0_i32_0 : i32, i32
  }
  func.func @transform_5(%arg0: i32, %arg1: i32) -> (i32, i32) {
    %c0_i32 = arith.constant 0 : i32
    %c0_i32_0 = arith.constant 0 : i32
    %c0_i32_1 = arith.constant 0 : i32
    return %c0_i32, %c0_i32_0 : i32, i32
  }
  func.func @transform_6(%arg0: i32, %arg1: i32) -> (i32, i32) {
    %c0_i32 = arith.constant 0 : i32
    %c0_i32_0 = arith.constant 0 : i32
    %c0_i32_1 = arith.constant 0 : i32
    return %c0_i32, %c0_i32_0 : i32, i32
  }
  func.func @transform_7(%arg0: i32, %arg1: i32) -> (i32, i32) {
    %c0_i32 = arith.constant 0 : i32
    %c0_i32_0 = arith.constant 0 : i32
    %c0_i32_1 = arith.constant 0 : i32
    return %c0_i32, %c0_i32_0 : i32, i32
  }
  func.func @transform_8(%arg0: i32, %arg1: i32) -> (i32, i32) {
    %c0_i32 = arith.constant 0 : i32
    %c0_i32_0 = arith.constant 0 : i32
    %c0_i32_1 = arith.constant 0 : i32
    return %c0_i32, %c0_i32_0 : i32, i32
  }
}

</mosaic_0001>

<llo_original>
// kernel: tpu_custom_call.1
$region0: #{tpu_custom_call.1}
  #allocation0 [shape = 'u32[]', space=smem, size = 0x4, offset = 0x4, fixed_abs, tag = 'smem constant byte address 0x4 - core index']
  #allocation1 [shape = 'u32[144,128]{1,0:T(1,128)}', space=vmem, size = 0x12000, scoped, tag = 'internal scratch']
  #allocation2 [shape = 'bf16[128,128]{1,0:T(16,128)(2,1)}', space=vmem, size = 0x8000, scoped, tag = 'scratch operand']
  #allocation3 [shape = 'bf16[128,128]{1,0:T(16,128)(2,1)}', space=vmem, size = 0x8000, scoped, tag = 'scratch operand']
  %s0 = inlined_call_operand.hbm [shape: bf16[128,128], index: 0, kind: input, shape index: {}]
  %s1 = inlined_call_operand.hbm [shape: bf16[128,128], index: 1, kind: input, shape index: {}]
  %s2 = inlined_call_operand.hbm [shape: bf16[16,128], index: 2, kind: input, shape index: {}]
  %s3 = inlined_call_operand.vmem [shape: f32[1,128], index: 3, kind: input, shape index: {}]
  %s4 = inlined_call_operand.hbm [shape: bf16[128,128], index: 4, kind: input, shape index: {}]
  %s5 = inlined_call_operand.vmem [shape: f32[1,128], index: 5, kind: input, shape index: {}]
  %s6 = inlined_call_operand.hbm [shape: bf16[128,128], index: 6, kind: input, shape index: {}]
  %s7 = inlined_call_operand.vmem [shape: f32[1,128], index: 7, kind: input, shape index: {}]
  %s8 = inlined_call_operand.hbm [shape: f32[16,128], index: 8, kind: output, shape index: {}]
  %s9 = sld [smem:[#allocation0]]
  $region97: #{tpu_custom_call.1} parent=0
    _
  %s11 = ssub.s32 1, %s9
  %s12 = scalar_select 0, %s11, %s9
  $region1: #{tpu_custom_call.1} parent=0
    #allocation4 [shape = 'u8[32768]{0}', space=vmem, size = 0x8000, scoped, tag = 'input window, operand 0, single buffered']
    #allocation5 [shape = 's32[2]{0}', space=sflag, size = 0x8, scoped, tag = 'scoped memory for tpu_custom_call.1']
    #allocation6 [shape = 's32[2]{0}', space=sflag, size = 0x8, scoped, tag = 'scoped memory for tpu_custom_call.1']
    #allocation7 [shape = 'u8[32768]{0}', space=vmem, size = 0x8000, scoped, tag = 'input window, operand 1, single buffered']
    #allocation8 [shape = 's32[1]{0}', space=sflag, size = 0x4, scoped, tag = 'scoped memory for tpu_custom_call.1']
    #allocation9 [shape = 'u8[4096]{0}', space=vmem, size = 0x1000, scoped, tag = 'input window, operand 2, single buffered']
    #allocation10 [shape = 'u8[32768]{0}', space=vmem, size = 0x8000, scoped, tag = 'input window, operand 4, single buffered']
    #allocation11 [shape = 's32[1]{0}', space=sflag, size = 0x4, scoped, tag = 'scoped memory for tpu_custom_call.1']
    #allocation12 [shape = 'u8[32768]{0}', space=vmem, size = 0x8000, scoped, tag = 'input window, operand 6, single buffered']
    #allocation13 [shape = 'u8[8192]{0}', space=vmem, size = 0x2000, scoped, tag = 'output window, operand 0, single buffered']
    %13 = vsyncpa [#allocation5], 0
    %14 = vsyncpa [#allocation8], 0
    %15 = vsyncpa [#allocation11], 0
    %16 = vsyncpa [#allocation6], 0
    loop: start=0, step=1, limit=4
    $region2: #{tpu_custom_call.1} parent=1 // loop_pre_header
      _
    $region3: #{tpu_custom_call.1} parent=1 // loop_header
      %s18 = sphi 0, %s22
      %p19 = scmp.ge.s32.totalorder %s18, 4
      %s25 = sphi 0, %s37
      %s26 = sphi 0, %s33
      %s27 = sphi 0, %s25
      %s28 = sphi 0, %s26
      %s29 = sphi 0, %s27
      %s30 = sphi 0, %s28
      %s38 = sphi 0, %s38
      %s40 = sphi 0, %s38
      %s41 = sphi 0, %s40
      %s55 = sphi 0, %s41
      %s61 = sphi 0, %s63
      %s64 = sphi 0, %s61
      %s65 = sphi 0, %s64
      %s81 = sphi 0, %s65
      %s85 = sphi 0, %s85
      %s87 = sphi 0, %s85
      %s88 = sphi 0, %s87
      %s102 = sphi 0, %s88
      %s106 = sphi 0, %s106
      %s108 = sphi 0, %s106
      %s109 = sphi 0, %s108
      %s123 = sphi 0, %s109
      %s127 = sphi 0, %s127
      %s129 = sphi 0, %s127
      %s130 = sphi 0, %s129
      %s144 = sphi 0, %s130
      %s148 = sphi 0, %s148
      %s150 = sphi 0, %s148
      %s151 = sphi 0, %s150
      %s165 = sphi 0, %s151
      %s169 = sphi 0, %s169
      %s171 = sphi 0, %s169
      %s172 = sphi 0, %s171
      %s186 = sphi 0, %s172
      %s190 = sphi 0, %s190
      %s192 = sphi 0, %s190
      %s193 = sphi 0, %s192
      %s207 = sphi 0, %s193
      %s211 = sphi 0, %s211
      %s213 = sphi 0, %s211
      %s214 = sphi 0, %s213
      %s228 = sphi 0, %s214
    $region4: #{tpu_custom_call.1} parent=1 // loop_header_branch
      %21 = sbr.rel (%p19) target = $region8
    $region5: #{tpu_custom_call.1} parent=1 // loop_body
      %s23 = ssub.s32 %s18, 1
      %s24 = ssub.s32 %s18, 2
      %s31 = sadd.s32 1, %s26
      %p32 = scmp.ge.s32.totalorder %s31, 1
      %s33 = scalar_select %p32, 0, %s31
      %s34 = sadd.s32 1, %s25
      %s35 = scalar_select %p32, %s34, %s25
      %p36 = scmp.ge.s32.totalorder %s35, 2
      %s37 = scalar_select %p36, 0, %s35
      %s39 = sadd.s32 %s38, 1
      %p42 = scmp.eq.s32.totalorder %s18, 1
      %p43 = scmp.ne.s32.totalorder %s38, %s40
      %p44 = scmp.eq.s32.totalorder %s18, 0
      %p45 = por %p43, %p44
      %p46 = scmp.ne.s32.totalorder %s38, %s40
      %p47 = scmp.eq.s32.totalorder %s23, 1
      %p48 = por %p46, %p47
      %p49 = scmp.ne.s32.totalorder %s40, %s41
      %p50 = scmp.eq.s32.totalorder %s23, 0
      %p51 = por %p49, %p50
      %p52 = scmp.ne.s32.totalorder %s40, %s41
      %p53 = scmp.eq.s32.totalorder %s24, 1
      %p54 = por %p52, %p53
      %p56 = scmp.ne.s32.totalorder %s41, %s55
      %p57 = scmp.eq.s32.totalorder %s24, 0
      %p58 = por %p56, %p57
      %s59 = ssub.s32 %s26, %s33
      %p60 = scmp.eq.s32.totalorder %s59, 0
      %s62 = sadd.s32 %s61, 1
      %s63 = scalar_select %p60, %s61, %s62
      %p66 = pneg %p60
      %p67 = scmp.eq.s32.totalorder %s18, 1
      %p68 = por %p66, %p67
      %p69 = scmp.ne.s32.totalorder %s61, %s64
      %p70 = scmp.eq.s32.totalorder %s18, 0
      %p71 = por %p69, %p70
      %p72 = scmp.ne.s32.totalorder %s61, %s64
      %p73 = scmp.eq.s32.totalorder %s23, 1
      %p74 = por %p72, %p73
      %p75 = scmp.ne.s32.totalorder %s64, %s65
      %p76 = scmp.eq.s32.totalorder %s23, 0
      %p77 = por %p75, %p76
      %p78 = scmp.ne.s32.totalorder %s64, %s65
      %p79 = scmp.eq.s32.totalorder %s24, 1
      %p80 = por %p78, %p79
      %p82 = scmp.ne.s32.totalorder %s65, %s81
      %p83 = scmp.eq.s32.totalorder %s24, 0
      %p84 = por %p82, %p83
      %s86 = sadd.s32 %s85, 1
      %p89 = scmp.eq.s32.totalorder %s18, 1
      %p90 = scmp.ne.s32.totalorder %s85, %s87
      %p91 = scmp.eq.s32.totalorder %s18, 0
      %p92 = por %p90, %p91
      %p93 = scmp.ne.s32.totalorder %s85, %s87
      %p94 = scmp.eq.s32.totalorder %s23, 1
      %p95 = por %p93, %p94
      %p96 = scmp.ne.s32.totalorder %s87, %s88
      %p97 = scmp.eq.s32.totalorder %s23, 0
      %p98 = por %p96, %p97
      %p99 = scmp.ne.s32.totalorder %s87, %s88
      %p100 = scmp.eq.s32.totalorder %s24, 1
      %p101 = por %p99, %p100
      %p103 = scmp.ne.s32.totalorder %s88, %s102
      %p104 = scmp.eq.s32.totalorder %s24, 0
      %p105 = por %p103, %p104
      %s107 = sadd.s32 %s106, 1
      %p110 = scmp.eq.s32.totalorder %s18, 1
      %p111 = scmp.ne.s32.totalorder %s106, %s108
      %p112 = scmp.eq.s32.totalorder %s18, 0
      %p113 = por %p111, %p112
      %p114 = scmp.ne.s32.totalorder %s106, %s108
      %p115 = scmp.eq.s32.totalorder %s23, 1
      %p116 = por %p114, %p115
      %p117 = scmp.ne.s32.totalorder %s108, %s109
      %p118 = scmp.eq.s32.totalorder %s23, 0
      %p119 = por %p117, %p118
      %p120 = scmp.ne.s32.totalorder %s108, %s109
      %p121 = scmp.eq.s32.totalorder %s24, 1
      %p122 = por %p120, %p121
      %p124 = scmp.ne.s32.totalorder %s109, %s123
      %p125 = scmp.eq.s32.totalorder %s24, 0
      %p126 = por %p124, %p125
      %s128 = sadd.s32 %s127, 1
      %p131 = scmp.eq.s32.totalorder %s18, 1
      %p132 = scmp.ne.s32.totalorder %s127, %s129
      %p133 = scmp.eq.s32.totalorder %s18, 0
      %p134 = por %p132, %p133
      %p135 = scmp.ne.s32.totalorder %s127, %s129
      %p136 = scmp.eq.s32.totalorder %s23, 1
      %p137 = por %p135, %p136
      %p138 = scmp.ne.s32.totalorder %s129, %s130
      %p139 = scmp.eq.s32.totalorder %s23, 0
      %p140 = por %p138, %p139
      %p141 = scmp.ne.s32.totalorder %s129, %s130
      %p142 = scmp.eq.s32.totalorder %s24, 1
      %p143 = por %p141, %p142
      %p145 = scmp.ne.s32.totalorder %s130, %s144
      %p146 = scmp.eq.s32.totalorder %s24, 0
      %p147 = por %p145, %p146
      %s149 = sadd.s32 %s148, 1
      %p152 = scmp.eq.s32.totalorder %s18, 1
      %p153 = scmp.ne.s32.totalorder %s148, %s150
      %p154 = scmp.eq.s32.totalorder %s18, 0
      %p155 = por %p153, %p154
      %p156 = scmp.ne.s32.totalorder %s148, %s150
      %p157 = scmp.eq.s32.totalorder %s23, 1
      %p158 = por %p156, %p157
      %p159 = scmp.ne.s32.totalorder %s150, %s151
      %p160 = scmp.eq.s32.totalorder %s23, 0
      %p161 = por %p159, %p160
      %p162 = scmp.ne.s32.totalorder %s150, %s151
      %p163 = scmp.eq.s32.totalorder %s24, 1
      %p164 = por %p162, %p163
      %p166 = scmp.ne.s32.totalorder %s151, %s165
      %p167 = scmp.eq.s32.totalorder %s24, 0
      %p168 = por %p166, %p167
      %s170 = sadd.s32 %s169, 1
      %p173 = scmp.eq.s32.totalorder %s18, 1
      %p174 = scmp.ne.s32.totalorder %s169, %s171
      %p175 = scmp.eq.s32.totalorder %s18, 0
      %p176 = por %p174, %p175
      %p177 = scmp.ne.s32.totalorder %s169, %s171
      %p178 = scmp.eq.s32.totalorder %s23, 1
      %p179 = por %p177, %p178
      %p180 = scmp.ne.s32.totalorder %s171, %s172
      %p181 = scmp.eq.s32.totalorder %s23, 0
      %p182 = por %p180, %p181
      %p183 = scmp.ne.s32.totalorder %s171, %s172
      %p184 = scmp.eq.s32.totalorder %s24, 1
      %p185 = por %p183, %p184
      %p187 = scmp.ne.s32.totalorder %s172, %s186
      %p188 = scmp.eq.s32.totalorder %s24, 0
      %p189 = por %p187, %p188
      %s191 = sadd.s32 %s190, 1
      %p194 = scmp.eq.s32.totalorder %s18, 1
      %p195 = scmp.ne.s32.totalorder %s190, %s192
      %p196 = scmp.eq.s32.totalorder %s18, 0
      %p197 = por %p195, %p196
      %p198 = scmp.ne.s32.totalorder %s190, %s192
      %p199 = scmp.eq.s32.totalorder %s23, 1
      %p200 = por %p198, %p199
      %p201 = scmp.ne.s32.totalorder %s192, %s193
      %p202 = scmp.eq.s32.totalorder %s23, 0
      %p203 = por %p201, %p202
      %p204 = scmp.ne.s32.totalorder %s192, %s193
      %p205 = scmp.eq.s32.totalorder %s24, 1
      %p206 = por %p204, %p205
      %p208 = scmp.ne.s32.totalorder %s193, %s207
      %p209 = scmp.eq.s32.totalorder %s24, 0
      %p210 = por %p208, %p209
      %s212 = sadd.s32 %s211, 1
      %p215 = scmp.eq.s32.totalorder %s18, 1
      %p216 = scmp.ne.s32.totalorder %s211, %s213
      %p217 = scmp.eq.s32.totalorder %s18, 0
      %p218 = por %p216, %p217
      %p219 = scmp.ne.s32.totalorder %s211, %s213
      %p220 = scmp.eq.s32.totalorder %s23, 1
      %p221 = por %p219, %p220
      %p222 = scmp.ne.s32.totalorder %s213, %s214
      %p223 = scmp.eq.s32.totalorder %s23, 0
      %p224 = por %p222, %p223
      %p225 = scmp.ne.s32.totalorder %s213, %s214
      %p226 = scmp.eq.s32.totalorder %s24, 1
      %p227 = por %p225, %p226
      %p229 = scmp.ne.s32.totalorder %s214, %s228
      %p230 = scmp.eq.s32.totalorder %s24, 0
      %p231 = por %p229, %p230
      %p232 = scmp.le.s32.totalorder 1, %s18
      %p233 = scmp.lt.s32.totalorder %s18, 3
      %p234 = pnand %p232, %p233
      %p235 = pneg %p234
      // Predicated region
      $region9: #{tpu_custom_call.1} parent=5 // pred_check
        _
      $region10: #{tpu_custom_call.1} parent=5 // pred_check_branch
        %237 = sbr.rel (%p234) target = $region12
      $region11: #{tpu_custom_call.1} parent=5 // pred_region
        %s238 = ssub.s32 %s18, 1
        // Predicated region
        $region13: #{tpu_custom_call.1} parent=11 // pred_check
          %p239 = pneg %p51
        $region14: #{tpu_custom_call.1} parent=11 // pred_check_branch
          %241 = sbr.rel (%p239) target = $region16
        $region15: #{tpu_custom_call.1} parent=11 // pred_region
          %s243 = ssub.s32 1024, 1024
          %244 = vsyncadd [#allocation5], %s243
          %s245 = sshll.u32 [#allocation4], 4
          %s246 = int_to_ptr.vmem [resolvable:$true] %s245
          %251 = dma.hbm_to_vmem [thread:$0]  %s0, 1024, %s246, [#allocation5], 64, 64, 4
        $region16: #{tpu_custom_call.1} parent=11 // pred_fallthru
          _
        // Predicated region
        $region17: #{tpu_custom_call.1} parent=11 // pred_check
          %p252 = pneg %p77
        $region18: #{tpu_custom_call.1} parent=11 // pred_check_branch
          %254 = sbr.rel (%p252) target = $region20
        $region19: #{tpu_custom_call.1} parent=11 // pred_region
          %s255 = smul.u32 16, %s28
          %s257 = ssub.s32 1024, 1024
          %258 = vsyncadd [#allocation8], %s257
          %s259 = smul.addr %s255, 64
          %s260 = scalar_lea.hbm %s1, %s259
          %s261 = sshll.u32 [#allocation7], 4
          %s262 = int_to_ptr.vmem [resolvable:$true] %s261
          %267 = dma.hbm_to_vmem [thread:$0]  %s260, 1024, %s262, [#allocation8], 64, 64, 4
        $region20: #{tpu_custom_call.1} parent=11 // pred_fallthru
          _
        // Predicated region
        $region21: #{tpu_custom_call.1} parent=11 // pred_check
          %p268 = pneg %p98
        $region22: #{tpu_custom_call.1} parent=11 // pred_check_branch
          %270 = sbr.rel (%p268) target = $region24
        $region23: #{tpu_custom_call.1} parent=11 // pred_region
          %s272 = ssub.s32 128, 128
          %273 = vsyncadd [#allocation8], %s272
          %s274 = sshll.u32 [#allocation9], 4
          %s275 = int_to_ptr.vmem [resolvable:$true] %s274
          %280 = dma.hbm_to_vmem [thread:$0]  %s2, 128, %s275, [#allocation8], 64, 64, 4
        $region24: #{tpu_custom_call.1} parent=11 // pred_fallthru
          _
        // Predicated region
        $region25: #{tpu_custom_call.1} parent=11 // pred_check
          %p281 = pneg %p119
        $region26: #{tpu_custom_call.1} parent=11 // pred_check_branch
          %283 = sbr.rel (%p281) target = $region28
        $region27: #{tpu_custom_call.1} parent=11 // pred_region
          _
        $region28: #{tpu_custom_call.1} parent=11 // pred_fallthru
          _
        // Predicated region
        $region29: #{tpu_custom_call.1} parent=11 // pred_check
          %p284 = pneg %p140
        $region30: #{tpu_custom_call.1} parent=11 // pred_check_branch
          %286 = sbr.rel (%p284) target = $region32
        $region31: #{tpu_custom_call.1} parent=11 // pred_region
          %s288 = ssub.s32 1024, 1024
          %289 = vsyncadd [#allocation11], %s288
          %s290 = sshll.u32 [#allocation10], 4
          %s291 = int_to_ptr.vmem [resolvable:$true] %s290
          %296 = dma.hbm_to_vmem [thread:$0]  %s4, 1024, %s291, [#allocation11], 64, 64, 4
        $region32: #{tpu_custom_call.1} parent=11 // pred_fallthru
          _
        // Predicated region
        $region33: #{tpu_custom_call.1} parent=11 // pred_check
          %p297 = pneg %p161
        $region34: #{tpu_custom_call.1} parent=11 // pred_check_branch
          %299 = sbr.rel (%p297) target = $region36
        $region35: #{tpu_custom_call.1} parent=11 // pred_region
          _
        $region36: #{tpu_custom_call.1} parent=11 // pred_fallthru
          _
        // Predicated region
        $region37: #{tpu_custom_call.1} parent=11 // pred_check
          %p300 = pneg %p182
        $region38: #{tpu_custom_call.1} parent=11 // pred_check_branch
          %302 = sbr.rel (%p300) target = $region40
        $region39: #{tpu_custom_call.1} parent=11 // pred_region
          %s304 = ssub.s32 1024, 1024
          %305 = vsyncadd [#allocation11], %s304
          %s306 = sshll.u32 [#allocation12], 4
          %s307 = int_to_ptr.vmem [resolvable:$true] %s306
          %312 = dma.hbm_to_vmem [thread:$0]  %s6, 1024, %s307, [#allocation11], 64, 64, 4
        $region40: #{tpu_custom_call.1} parent=11 // pred_fallthru
          _
        // Predicated region
        $region41: #{tpu_custom_call.1} parent=11 // pred_check
          %p313 = pneg %p203
        $region42: #{tpu_custom_call.1} parent=11 // pred_check_branch
          %315 = sbr.rel (%p313) target = $region44
        $region43: #{tpu_custom_call.1} parent=11 // pred_region
          _
        $region44: #{tpu_custom_call.1} parent=11 // pred_fallthru
          _
      $region12: #{tpu_custom_call.1} parent=5 // pred_fallthru
        _
      %p316 = scmp.lt.s32.totalorder %s18, 2
      // Predicated region
      $region45: #{tpu_custom_call.1} parent=5 // pred_check
        %p317 = pneg %p316
      $region46: #{tpu_custom_call.1} parent=5 // pred_check_branch
        %319 = sbr.rel (%p317) target = $region48
      $region47: #{tpu_custom_call.1} parent=5 // pred_region
        _
      $region48: #{tpu_custom_call.1} parent=5 // pred_fallthru
        _
      %p320 = scmp.le.s32.totalorder 1, %s18
      %p321 = scmp.lt.s32.totalorder %s18, 3
      %p322 = pnand %p320, %p321
      %p323 = pneg %p322
      // Predicated region
      $region49: #{tpu_custom_call.1} parent=5 // pred_check
        _
      $region50: #{tpu_custom_call.1} parent=5 // pred_check_branch
        %325 = sbr.rel (%p322) target = $region52
      $region51: #{tpu_custom_call.1} parent=5 // pred_region
        %s326 = ssub.s32 %s18, 1
        // Predicated region
        $region53: #{tpu_custom_call.1} parent=51 // pred_check
          %p327 = pneg %p51
        $region54: #{tpu_custom_call.1} parent=51 // pred_check_branch
          %329 = sbr.rel (%p327) target = $region56
        $region55: #{tpu_custom_call.1} parent=51 // pred_region
          %330 = dma.done [#allocation5], 1024
        $region56: #{tpu_custom_call.1} parent=51 // pred_fallthru
          _
        // Predicated region
        $region57: #{tpu_custom_call.1} parent=51 // pred_check
          %p331 = pneg %p77
        $region58: #{tpu_custom_call.1} parent=51 // pred_check_branch
          %333 = sbr.rel (%p331) target = $region60
        $region59: #{tpu_custom_call.1} parent=51 // pred_region
          %334 = dma.done [#allocation8], 1024
        $region60: #{tpu_custom_call.1} parent=51 // pred_fallthru
          _
        // Predicated region
        $region61: #{tpu_custom_call.1} parent=51 // pred_check
          %p335 = pneg %p98
        $region62: #{tpu_custom_call.1} parent=51 // pred_check_branch
          %337 = sbr.rel (%p335) target = $region64
        $region63: #{tpu_custom_call.1} parent=51 // pred_region
          %338 = dma.done [#allocation8], 128
        $region64: #{tpu_custom_call.1} parent=51 // pred_fallthru
          _
        // Predicated region
        $region65: #{tpu_custom_call.1} parent=51 // pred_check
          %p339 = pneg %p140
        $region66: #{tpu_custom_call.1} parent=51 // pred_check_branch
          %341 = sbr.rel (%p339) target = $region68
        $region67: #{tpu_custom_call.1} parent=51 // pred_region
          %342 = dma.done [#allocation11], 1024
        $region68: #{tpu_custom_call.1} parent=51 // pred_fallthru
          _
        // Predicated region
        $region69: #{tpu_custom_call.1} parent=51 // pred_check
          %p343 = pneg %p182
        $region70: #{tpu_custom_call.1} parent=51 // pred_check_branch
          %345 = sbr.rel (%p343) target = $region72
        $region71: #{tpu_custom_call.1} parent=51 // pred_region
          %346 = dma.done [#allocation11], 1024
        $region72: #{tpu_custom_call.1} parent=51 // pred_fallthru
          _
        %p347 = pneg %p51
        %p348 = pneg %p48
        %p349 = pneg %p77
        %p350 = pneg %p74
        %p351 = pneg %p98
        %p352 = pneg %p95
        %p353 = pneg %p119
        %p354 = pneg %p116
        %p355 = pneg %p140
        %p356 = pneg %p137
        %p357 = pneg %p161
        %p358 = pneg %p158
        %p359 = pneg %p182
        %p360 = pneg %p179
        %p361 = pneg %p203
        %p362 = pneg %p200
        %p363 = pneg %p224
        %p364 = pneg %p221
        %s365 = smul.u32 16, %s28
        %s367 = smul.u32 %s28, 128
        %v368 = vld [vmem:[#allocation7] sm:$0xf]
        %v369 = vld [vmem:[#allocation7 + $0x4] sm:$0xf]
        %v370 = vld [vmem:[#allocation7 + $0x8] sm:$0xf]
        %v371 = vld [vmem:[#allocation7 + $0xc] sm:$0xf]
        %v372 = vld [vmem:[#allocation7 + $0x10] sm:$0xf]
        %v373 = vld [vmem:[#allocation7 + $0x14] sm:$0xf]
        %v374 = vld [vmem:[#allocation7 + $0x18] sm:$0xf]
        %v375 = vld [vmem:[#allocation7 + $0x1c] sm:$0xf]
        %v376 = vld [vmem:[#allocation7 + $0x20] sm:$0xf]
        %v377 = vld [vmem:[#allocation7 + $0x24] sm:$0xf]
        %v378 = vld [vmem:[#allocation7 + $0x28] sm:$0xf]
        %v379 = vld [vmem:[#allocation7 + $0x2c] sm:$0xf]
        %v380 = vld [vmem:[#allocation7 + $0x30] sm:$0xf]
        %v381 = vld [vmem:[#allocation7 + $0x34] sm:$0xf]
        %v382 = vld [vmem:[#allocation7 + $0x38] sm:$0xf]
        %v383 = vld [vmem:[#allocation7 + $0x3c] sm:$0xf]
        %p384 = scmp.eq.s32.totalorder %s27, 0
        // Predicated region
        $region73: #{tpu_custom_call.1} parent=51 // pred_check
          %p385 = pneg %p384
        $region74: #{tpu_custom_call.1} parent=51 // pred_check_branch
          %387 = sbr.rel (%p385) target = $region76
        $region75: #{tpu_custom_call.1} parent=51 // pred_region
          %v388 = vld [vmem:[#allocation4] sm:$0xf]
          %v389 = vld [vmem:[#allocation4 + $0x4] sm:$0xf]
          %v390 = vld [vmem:[#allocation4 + $0x8] sm:$0xf]
          %v391 = vld [vmem:[#allocation4 + $0xc] sm:$0xf]
          %v392 = vld [vmem:[#allocation4 + $0x10] sm:$0xf]
          %v393 = vld [vmem:[#allocation4 + $0x14] sm:$0xf]
          %v394 = vld [vmem:[#allocation4 + $0x18] sm:$0xf]
          %v395 = vld [vmem:[#allocation4 + $0x1c] sm:$0xf]
          %v396 = vld [vmem:[#allocation4 + $0x20] sm:$0xf]
          %v397 = vld [vmem:[#allocation4 + $0x24] sm:$0xf]
          %v398 = vld [vmem:[#allocation4 + $0x28] sm:$0xf]
          %v399 = vld [vmem:[#allocation4 + $0x2c] sm:$0xf]
          %v400 = vld [vmem:[#allocation4 + $0x30] sm:$0xf]
          %v401 = vld [vmem:[#allocation4 + $0x34] sm:$0xf]
          %v402 = vld [vmem:[#allocation4 + $0x38] sm:$0xf]
          %v403 = vld [vmem:[#allocation4 + $0x3c] sm:$0xf]
          %v404 = vld [vmem:[%s3] sm:$0x1]
          %v406 = vlaneseq
          %v407 = vshrl.u32 %v406, 7
          %v408 = vsub.s32 0, %v407
          %v409 = vrot.slane %v404, %v408
          %v427 = vunpack.c.l.b16 %v368
          %v428 = vunpack.c.l.b16 %v369
          %v429 = vunpack.c.l.b16 %v370
          %v430 = vunpack.c.l.b16 %v371
          %v431 = vunpack.c.l.b16 %v372
          %v432 = vunpack.c.l.b16 %v373
          %v433 = vunpack.c.l.b16 %v374
          %v434 = vunpack.c.l.b16 %v375
          %v435 = vunpack.c.l.b16 %v376
          %v436 = vunpack.c.l.b16 %v377
          %v437 = vunpack.c.l.b16 %v378
          %v438 = vunpack.c.l.b16 %v379
          %v439 = vunpack.c.l.b16 %v380
          %v440 = vunpack.c.l.b16 %v381
          %v441 = vunpack.c.l.b16 %v382
          %v442 = vunpack.c.l.b16 %v383
          %v443 = vpack.c.b16 %v428, %v427
          %v444 = vpack.c.b16 %v430, %v429
          %v445 = vpack.c.b16 %v432, %v431
          %v446 = vpack.c.b16 %v434, %v433
          %v447 = vpack.c.b16 %v436, %v435
          %v448 = vpack.c.b16 %v438, %v437
          %v449 = vpack.c.b16 %v440, %v439
          %v450 = vpack.c.b16 %v442, %v441
          %v475 = vunpack.c.l.b16 %v388
          %v476 = vunpack.c.l.b16 %v389
          %v477 = vunpack.c.l.b16 %v390
          %v478 = vunpack.c.l.b16 %v391
          %v479 = vunpack.c.l.b16 %v392
          %v480 = vunpack.c.l.b16 %v393
          %v481 = vunpack.c.l.b16 %v394
          %v482 = vunpack.c.l.b16 %v395
          %v483 = vunpack.c.l.b16 %v396
          %v484 = vunpack.c.l.b16 %v397
          %v485 = vunpack.c.l.b16 %v398
          %v486 = vunpack.c.l.b16 %v399
          %v487 = vunpack.c.l.b16 %v400
          %v488 = vunpack.c.l.b16 %v401
          %v489 = vunpack.c.l.b16 %v402
          %v490 = vunpack.c.l.b16 %v403
          %v491 = vpack.c.b16 %v476, %v475
          %v492 = vpack.c.b16 %v478, %v477
          %v493 = vpack.c.b16 %v480, %v479
          %v494 = vpack.c.b16 %v482, %v481
          %v495 = vpack.c.b16 %v484, %v483
          %v496 = vpack.c.b16 %v486, %v485
          %v497 = vpack.c.b16 %v488, %v487
          %v498 = vpack.c.b16 %v490, %v489
          %507 = vmatprep.subr.bf16.mxu0 0
          %508 = vmatpush1.bf16.msra.mxu0 %v491
          %509 = vmatprep.subr.bf16.mxu0 0
          %510 = vmatpush1.bf16.msra.mxu0 %v492
          %511 = vmatprep.subr.bf16.mxu0 0
          %512 = vmatpush1.bf16.msra.mxu0 %v493
          %513 = vmatprep.subr.bf16.mxu0 0
          %514 = vmatpush1.bf16.msra.mxu0 %v494
          %515 = vmatprep.subr.bf16.mxu0 0
          %516 = vmatpush1.bf16.msra.mxu0 %v495
          %517 = vmatprep.subr.bf16.mxu0 0
          %518 = vmatpush1.bf16.msra.mxu0 %v496
          %519 = vmatprep.subr.bf16.mxu0 0
          %520 = vmatpush1.bf16.msra.mxu0 %v497
          %521 = vmatprep.subr.bf16.mxu0 0
          %522 = vmatpush1.bf16.msra.mxu0 %v498
          %523 = vmatprep.subr.bf16.mxu0 0
          %524 = vmatpush1.bf16.msra.mxu0 0
          %525 = vmatprep.subr.bf16.mxu0 0
          %526 = vmatpush1.bf16.msra.mxu0 0
          %527 = vmatprep.subr.bf16.mxu0 0
          %528 = vmatpush1.bf16.msra.mxu0 0
          %529 = vmatprep.subr.bf16.mxu0 0
          %530 = vmatpush1.bf16.msra.mxu0 0
          %531 = vmatprep.subr.bf16.mxu0 0
          %532 = vmatpush1.bf16.msra.mxu0 0
          %533 = vmatprep.subr.bf16.mxu0 0
          %534 = vmatpush1.bf16.msra.mxu0 0
          %535 = vmatprep.subr.bf16.mxu0 0
          %536 = vmatpush1.bf16.msra.mxu0 0
          %537 = vmatprep.subr.bf16.mxu0 0
          %538 = vmatpush1.bf16.msra.mxu0 0
          %539 = vmatprep.mubr.bf16.mxu0 0
          %540 = vmatmul.mubr.bf16.gmra.mrb[0].mxu0 %v443
          %v541 = vpop.f32.mrb[0].mxu0
          %v542 = vadd.f32 %v409, %v541
          %v543 = vpop.f32.mrb[0].mxu0
          %v544 = vpop.f32.mrb[0].mxu0
          %v545 = vadd.f32 %v409, %v544
          %v546 = vpop.f32.mrb[0].mxu0
          %547 = vmatprep.mubr.bf16.mxu0 0
          %548 = vmatmul.mubr.bf16.gmra.mrb[0].mxu0 %v444
          %v549 = vpop.f32.mrb[0].mxu0
          %v550 = vadd.f32 %v409, %v549
          %v551 = vpop.f32.mrb[0].mxu0
          %v552 = vpop.f32.mrb[0].mxu0
          %v553 = vadd.f32 %v409, %v552
          %v554 = vpop.f32.mrb[0].mxu0
          %555 = vmatprep.mubr.bf16.mxu0 0
          %556 = vmatmul.mubr.bf16.gmra.mrb[0].mxu0 %v445
          %v557 = vpop.f32.mrb[0].mxu0
          %v558 = vadd.f32 %v409, %v557
          %v559 = vpop.f32.mrb[0].mxu0
          %v560 = vpop.f32.mrb[0].mxu0
          %v561 = vadd.f32 %v409, %v560
          %v562 = vpop.f32.mrb[0].mxu0
          %563 = vmatprep.mubr.bf16.mxu0 0
          %564 = vmatmul.mubr.bf16.gmra.mrb[0].mxu0 %v446
          %v565 = vpop.f32.mrb[0].mxu0
          %v566 = vadd.f32 %v409, %v565
          %v567 = vpop.f32.mrb[0].mxu0
          %v568 = vpop.f32.mrb[0].mxu0
          %v569 = vadd.f32 %v409, %v568
          %v570 = vpop.f32.mrb[0].mxu0
          %571 = vmatprep.mubr.bf16.mxu0 0
          %572 = vmatmul.mubr.bf16.gmra.mrb[0].mxu0 %v447
          %v573 = vpop.f32.mrb[0].mxu0
          %v574 = vadd.f32 %v409, %v573
          %v575 = vpop.f32.mrb[0].mxu0
          %v576 = vpop.f32.mrb[0].mxu0
          %v577 = vadd.f32 %v409, %v576
          %v578 = vpop.f32.mrb[0].mxu0
          %579 = vmatprep.mubr.bf16.mxu0 0
          %580 = vmatmul.mubr.bf16.gmra.mrb[0].mxu0 %v448
          %v581 = vpop.f32.mrb[0].mxu0
          %v582 = vadd.f32 %v409, %v581
          %v583 = vpop.f32.mrb[0].mxu0
          %v584 = vpop.f32.mrb[0].mxu0
          %v585 = vadd.f32 %v409, %v584
          %v586 = vpop.f32.mrb[0].mxu0
          %587 = vmatprep.mubr.bf16.mxu0 0
          %588 = vmatmul.mubr.bf16.gmra.mrb[0].mxu0 %v449
          %v589 = vpop.f32.mrb[0].mxu0
          %v590 = vadd.f32 %v409, %v589
          %v591 = vpop.f32.mrb[0].mxu0
          %v592 = vpop.f32.mrb[0].mxu0
          %v593 = vadd.f32 %v409, %v592
          %v594 = vpop.f32.mrb[0].mxu0
          %595 = vmatprep.mubr.bf16.mxu0 0
          %596 = vmatmul.mubr.bf16.gmra.mrb[0].mxu0 %v450
          %v597 = vpop.f32.mrb[0].mxu0
          %v598 = vadd.f32 %v409, %v597
          %v599 = vpop.f32.mrb[0].mxu0
          %v600 = vpop.f32.mrb[0].mxu0
          %v601 = vadd.f32 %v409, %v600
          %v602 = vpop.f32.mrb[0].mxu0
          %603 = vdwg.mxu0
          %v604 = vmax.f32 %v542, 0.0
          %v605 = vmax.f32 %v545, 0.0
          %v606 = vmax.f32 %v550, 0.0
          %v607 = vmax.f32 %v553, 0.0
          %v608 = vmax.f32 %v558, 0.0
          %v609 = vmax.f32 %v561, 0.0
          %v610 = vmax.f32 %v566, 0.0
          %v611 = vmax.f32 %v569, 0.0
          %v612 = vmax.f32 %v574, 0.0
          %v613 = vmax.f32 %v577, 0.0
          %v614 = vmax.f32 %v582, 0.0
          %v615 = vmax.f32 %v585, 0.0
          %v616 = vmax.f32 %v590, 0.0
          %v617 = vmax.f32 %v593, 0.0
          %v618 = vmax.f32 %v598, 0.0
          %v619 = vmax.f32 %v601, 0.0
          %v620 = vpack.c.bf16 %v605, %v604
          %v621 = vpack.c.bf16 %v607, %v606
          %v622 = vpack.c.bf16 %v609, %v608
          %v623 = vpack.c.bf16 %v611, %v610
          %v624 = vpack.c.bf16 %v613, %v612
          %v625 = vpack.c.bf16 %v615, %v614
          %v626 = vpack.c.bf16 %v617, %v616
          %v627 = vpack.c.bf16 %v619, %v618
          %v628 = vld [vmem:[#allocation10] sm:$0xf]
          %v629 = vld [vmem:[#allocation10 + $0x4] sm:$0xf]
          %v630 = vld [vmem:[#allocation10 + $0x8] sm:$0xf]
          %v631 = vld [vmem:[#allocation10 + $0xc] sm:$0xf]
          %v632 = vld [vmem:[#allocation10 + $0x10] sm:$0xf]
          %v633 = vld [vmem:[#allocation10 + $0x14] sm:$0xf]
          %v634 = vld [vmem:[#allocation10 + $0x18] sm:$0xf]
          %v635 = vld [vmem:[#allocation10 + $0x1c] sm:$0xf]
          %v636 = vld [vmem:[#allocation10 + $0x20] sm:$0xf]
          %v637 = vld [vmem:[#allocation10 + $0x24] sm:$0xf]
          %v638 = vld [vmem:[#allocation10 + $0x28] sm:$0xf]
          %v639 = vld [vmem:[#allocation10 + $0x2c] sm:$0xf]
          %v640 = vld [vmem:[#allocation10 + $0x30] sm:$0xf]
          %v641 = vld [vmem:[#allocation10 + $0x34] sm:$0xf]
          %v642 = vld [vmem:[#allocation10 + $0x38] sm:$0xf]
          %v643 = vld [vmem:[#allocation10 + $0x3c] sm:$0xf]
          %v660 = vunpack.c.l.b16 %v628
          %v661 = vunpack.c.l.b16 %v629
          %v662 = vunpack.c.l.b16 %v630
          %v663 = vunpack.c.l.b16 %v631
          %v664 = vunpack.c.l.b16 %v632
          %v665 = vunpack.c.l.b16 %v633
          %v666 = vunpack.c.l.b16 %v634
          %v667 = vunpack.c.l.b16 %v635
          %v668 = vunpack.c.l.b16 %v636
          %v669 = vunpack.c.l.b16 %v637
          %v670 = vunpack.c.l.b16 %v638
          %v671 = vunpack.c.l.b16 %v639
          %v672 = vunpack.c.l.b16 %v640
          %v673 = vunpack.c.l.b16 %v641
          %v674 = vunpack.c.l.b16 %v642
          %v675 = vunpack.c.l.b16 %v643
          %v676 = vpack.c.b16 %v661, %v660
          %v677 = vpack.c.b16 %v663, %v662
          %v678 = vpack.c.b16 %v665, %v664
          %v679 = vpack.c.b16 %v667, %v666
          %v680 = vpack.c.b16 %v669, %v668
          %v681 = vpack.c.b16 %v671, %v670
          %v682 = vpack.c.b16 %v673, %v672
          %v683 = vpack.c.b16 %v675, %v674
          %692 = vmatprep.subr.bf16.mxu0 0
          %693 = vmatpush1.bf16.msra.mxu0 %v676
          %694 = vmatprep.subr.bf16.mxu0 0
          %695 = vmatpush1.bf16.msra.mxu0 %v677
          %696 = vmatprep.subr.bf16.mxu0 0
          %697 = vmatpush1.bf16.msra.mxu0 %v678
          %698 = vmatprep.subr.bf16.mxu0 0
          %699 = vmatpush1.bf16.msra.mxu0 %v679
          %700 = vmatprep.subr.bf16.mxu0 0
          %701 = vmatpush1.bf16.msra.mxu0 %v680
          %702 = vmatprep.subr.bf16.mxu0 0
          %703 = vmatpush1.bf16.msra.mxu0 %v681
          %704 = vmatprep.subr.bf16.mxu0 0
          %705 = vmatpush1.bf16.msra.mxu0 %v682
          %706 = vmatprep.subr.bf16.mxu0 0
          %707 = vmatpush1.bf16.msra.mxu0 %v683
          %708 = vmatprep.subr.bf16.mxu0 0
          %709 = vmatpush1.bf16.msra.mxu0 0
          %710 = vmatprep.subr.bf16.mxu0 0
          %711 = vmatpush1.bf16.msra.mxu0 0
          %712 = vmatprep.subr.bf16.mxu0 0
          %713 = vmatpush1.bf16.msra.mxu0 0
          %714 = vmatprep.subr.bf16.mxu0 0
          %715 = vmatpush1.bf16.msra.mxu0 0
          %716 = vmatprep.subr.bf16.mxu0 0
          %717 = vmatpush1.bf16.msra.mxu0 0
          %718 = vmatprep.subr.bf16.mxu0 0
          %719 = vmatpush1.bf16.msra.mxu0 0
          %720 = vmatprep.subr.bf16.mxu0 0
          %721 = vmatpush1.bf16.msra.mxu0 0
          %722 = vmatprep.subr.bf16.mxu0 0
          %723 = vmatpush1.bf16.msra.mxu0 0
          %724 = vmatprep.mubr.bf16.mxu0 0
          %725 = vmatmul.mubr.bf16.gmra.mrb[0].mxu0 %v620
          %v726 = vpop.f32.mrb[0].mxu0
          %v727 = vadd.f32 0.0, %v726
          %v728 = vpop.f32.mrb[0].mxu0
          %v729 = vpop.f32.mrb[0].mxu0
          %v730 = vadd.f32 0.0, %v729
          %v731 = vpop.f32.mrb[0].mxu0
          %732 = vmatprep.mubr.bf16.mxu0 0
          %733 = vmatmul.mubr.bf16.gmra.mrb[0].mxu0 %v621
          %v734 = vpop.f32.mrb[0].mxu0
          %v735 = vadd.f32 0.0, %v734
          %v736 = vpop.f32.mrb[0].mxu0
          %v737 = vpop.f32.mrb[0].mxu0
          %v738 = vadd.f32 0.0, %v737
          %v739 = vpop.f32.mrb[0].mxu0
          %740 = vmatprep.mubr.bf16.mxu0 0
          %741 = vmatmul.mubr.bf16.gmra.mrb[0].mxu0 %v622
          %v742 = vpop.f32.mrb[0].mxu0
          %v743 = vadd.f32 0.0, %v742
          %v744 = vpop.f32.mrb[0].mxu0
          %v745 = vpop.f32.mrb[0].mxu0
          %v746 = vadd.f32 0.0, %v745
          %v747 = vpop.f32.mrb[0].mxu0
          %748 = vmatprep.mubr.bf16.mxu0 0
          %749 = vmatmul.mubr.bf16.gmra.mrb[0].mxu0 %v623
          %v750 = vpop.f32.mrb[0].mxu0
          %v751 = vadd.f32 0.0, %v750
          %v752 = vpop.f32.mrb[0].mxu0
          %v753 = vpop.f32.mrb[0].mxu0
          %v754 = vadd.f32 0.0, %v753
          %v755 = vpop.f32.mrb[0].mxu0
          %756 = vmatprep.mubr.bf16.mxu0 0
          %757 = vmatmul.mubr.bf16.gmra.mrb[0].mxu0 %v624
          %v758 = vpop.f32.mrb[0].mxu0
          %v759 = vadd.f32 0.0, %v758
          %v760 = vpop.f32.mrb[0].mxu0
          %v761 = vpop.f32.mrb[0].mxu0
          %v762 = vadd.f32 0.0, %v761
          %v763 = vpop.f32.mrb[0].mxu0
          %764 = vmatprep.mubr.bf16.mxu0 0
          %765 = vmatmul.mubr.bf16.gmra.mrb[0].mxu0 %v625
          %v766 = vpop.f32.mrb[0].mxu0
          %v767 = vadd.f32 0.0, %v766
          %v768 = vpop.f32.mrb[0].mxu0
          %v769 = vpop.f32.mrb[0].mxu0
          %v770 = vadd.f32 0.0, %v769
          %v771 = vpop.f32.mrb[0].mxu0
          %772 = vmatprep.mubr.bf16.mxu0 0
          %773 = vmatmul.mubr.bf16.gmra.mrb[0].mxu0 %v626
          %v774 = vpop.f32.mrb[0].mxu0
          %v775 = vadd.f32 0.0, %v774
          %v776 = vpop.f32.mrb[0].mxu0
          %v777 = vpop.f32.mrb[0].mxu0
          %v778 = vadd.f32 0.0, %v777
          %v779 = vpop.f32.mrb[0].mxu0
          %780 = vmatprep.mubr.bf16.mxu0 0
          %781 = vmatmul.mubr.bf16.gmra.mrb[0].mxu0 %v627
          %v782 = vpop.f32.mrb[0].mxu0
          %v783 = vadd.f32 0.0, %v782
          %v784 = vpop.f32.mrb[0].mxu0
          %v785 = vpop.f32.mrb[0].mxu0
          %v786 = vadd.f32 0.0, %v785
          %v787 = vpop.f32.mrb[0].mxu0
          %788 = vdwg.mxu0
          %v789 = vpack.c.bf16 %v730, %v727
          %v790 = vpack.c.bf16 %v738, %v735
          %v791 = vpack.c.bf16 %v746, %v743
          %v792 = vpack.c.bf16 %v754, %v751
          %v793 = vpack.c.bf16 %v762, %v759
          %v794 = vpack.c.bf16 %v770, %v767
          %v795 = vpack.c.bf16 %v778, %v775
          %v796 = vpack.c.bf16 %v786, %v783
          %s797 = sshra.s32 %s367, 4
          %s798 = sand.u32 %s367, 15
          %s799 = smul.addr %s797, 8
          %s800 = scalar_lea.vmem [#allocation2], %s799
          %801 = vst [vmem:[%s800] sm:$0xff] %v789
          %802 = vst [vmem:[%s800 + $0x8] sm:$0xff] %v790
          %803 = vst [vmem:[%s800 + $0x10] sm:$0xff] %v791
          %804 = vst [vmem:[%s800 + $0x18] sm:$0xff] %v792
          %805 = vst [vmem:[%s800 + $0x20] sm:$0xff] %v793
          %806 = vst [vmem:[%s800 + $0x28] sm:$0xff] %v794
          %807 = vst [vmem:[%s800 + $0x30] sm:$0xff] %v795
          %808 = vst [vmem:[%s800 + $0x38] sm:$0xff] %v796
        $region76: #{tpu_custom_call.1} parent=51 // pred_fallthru
          _
        %p809 = scmp.eq.s32.totalorder %s27, 1
        // Predicated region
        $region77: #{tpu_custom_call.1} parent=51 // pred_check
          %p810 = pneg %p809
        $region78: #{tpu_custom_call.1} parent=51 // pred_check_branch
          %812 = sbr.rel (%p810) target = $region80
        $region79: #{tpu_custom_call.1} parent=51 // pred_region
          %v813 = vld [vmem:[#allocation2] sm:$0xff]
          %v814 = vld [vmem:[#allocation2 + $0x8] sm:$0xff]
          %v815 = vld [vmem:[#allocation2 + $0x10] sm:$0xff]
          %v816 = vld [vmem:[#allocation2 + $0x18] sm:$0xff]
          %v817 = vld [vmem:[#allocation2 + $0x20] sm:$0xff]
          %v818 = vld [vmem:[#allocation2 + $0x28] sm:$0xff]
          %v819 = vld [vmem:[#allocation2 + $0x30] sm:$0xff]
          %v820 = vld [vmem:[#allocation2 + $0x38] sm:$0xff]
          %v821 = vld [vmem:[%s5] sm:$0x1]
          %v823 = vlaneseq
          %v824 = vshrl.u32 %v823, 7
          %v825 = vsub.s32 0, %v824
          %v826 = vrot.slane %v821, %v825
          %v844 = vunpack.c.l.b16 %v368
          %v845 = vunpack.c.l.b16 %v369
          %v846 = vunpack.c.l.b16 %v370
          %v847 = vunpack.c.l.b16 %v371
          %v848 = vunpack.c.l.b16 %v372
          %v849 = vunpack.c.l.b16 %v373
          %v850 = vunpack.c.l.b16 %v374
          %v851 = vunpack.c.l.b16 %v375
          %v852 = vunpack.c.l.b16 %v376
          %v853 = vunpack.c.l.b16 %v377
          %v854 = vunpack.c.l.b16 %v378
          %v855 = vunpack.c.l.b16 %v379
          %v856 = vunpack.c.l.b16 %v380
          %v857 = vunpack.c.l.b16 %v381
          %v858 = vunpack.c.l.b16 %v382
          %v859 = vunpack.c.l.b16 %v383
          %v860 = vpack.c.b16 %v845, %v844
          %v861 = vpack.c.b16 %v847, %v846
          %v862 = vpack.c.b16 %v849, %v848
          %v863 = vpack.c.b16 %v851, %v850
          %v864 = vpack.c.b16 %v853, %v852
          %v865 = vpack.c.b16 %v855, %v854
          %v866 = vpack.c.b16 %v857, %v856
          %v867 = vpack.c.b16 %v859, %v858
          %876 = vmatprep.subr.bf16.mxu0 0
          %877 = vmatpush1.bf16.msra.mxu0 %v813
          %878 = vmatprep.subr.bf16.mxu0 0
          %879 = vmatpush1.bf16.msra.mxu0 %v814
          %880 = vmatprep.subr.bf16.mxu0 0
          %881 = vmatpush1.bf16.msra.mxu0 %v815
          %882 = vmatprep.subr.bf16.mxu0 0
          %883 = vmatpush1.bf16.msra.mxu0 %v816
          %884 = vmatprep.subr.bf16.mxu0 0
          %885 = vmatpush1.bf16.msra.mxu0 %v817
          %886 = vmatprep.subr.bf16.mxu0 0
          %887 = vmatpush1.bf16.msra.mxu0 %v818
          %888 = vmatprep.subr.bf16.mxu0 0
          %889 = vmatpush1.bf16.msra.mxu0 %v819
          %890 = vmatprep.subr.bf16.mxu0 0
          %891 = vmatpush1.bf16.msra.mxu0 %v820
          %892 = vmatprep.subr.bf16.mxu0 0
          %893 = vmatpush1.bf16.msra.mxu0 0
          %894 = vmatprep.subr.bf16.mxu0 0
          %895 = vmatpush1.bf16.msra.mxu0 0
          %896 = vmatprep.subr.bf16.mxu0 0
          %897 = vmatpush1.bf16.msra.mxu0 0
          %898 = vmatprep.subr.bf16.mxu0 0
          %899 = vmatpush1.bf16.msra.mxu0 0
          %900 = vmatprep.subr.bf16.mxu0 0
          %901 = vmatpush1.bf16.msra.mxu0 0
          %902 = vmatprep.subr.bf16.mxu0 0
          %903 = vmatpush1.bf16.msra.mxu0 0
          %904 = vmatprep.subr.bf16.mxu0 0
          %905 = vmatpush1.bf16.msra.mxu0 0
          %906 = vmatprep.subr.bf16.mxu0 0
          %907 = vmatpush1.bf16.msra.mxu0 0
          %908 = vmatprep.mubr.bf16.mxu0 0
          %909 = vmatmul.mubr.bf16.gmra.mrb[0].mxu0 %v860
          %v910 = vpop.f32.mrb[0].mxu0
          %v911 = vadd.f32 %v826, %v910
          %v912 = vpop.f32.mrb[0].mxu0
          %v913 = vpop.f32.mrb[0].mxu0
          %v914 = vadd.f32 %v826, %v913
          %v915 = vpop.f32.mrb[0].mxu0
          %916 = vmatprep.mubr.bf16.mxu0 0
          %917 = vmatmul.mubr.bf16.gmra.mrb[0].mxu0 %v861
          %v918 = vpop.f32.mrb[0].mxu0
          %v919 = vadd.f32 %v826, %v918
          %v920 = vpop.f32.mrb[0].mxu0
          %v921 = vpop.f32.mrb[0].mxu0
          %v922 = vadd.f32 %v826, %v921
          %v923 = vpop.f32.mrb[0].mxu0
          %924 = vmatprep.mubr.bf16.mxu0 0
          %925 = vmatmul.mubr.bf16.gmra.mrb[0].mxu0 %v862
          %v926 = vpop.f32.mrb[0].mxu0
          %v927 = vadd.f32 %v826, %v926
          %v928 = vpop.f32.mrb[0].mxu0
          %v929 = vpop.f32.mrb[0].mxu0
          %v930 = vadd.f32 %v826, %v929
          %v931 = vpop.f32.mrb[0].mxu0
          %932 = vmatprep.mubr.bf16.mxu0 0
          %933 = vmatmul.mubr.bf16.gmra.mrb[0].mxu0 %v863
          %v934 = vpop.f32.mrb[0].mxu0
          %v935 = vadd.f32 %v826, %v934
          %v936 = vpop.f32.mrb[0].mxu0
          %v937 = vpop.f32.mrb[0].mxu0
          %v938 = vadd.f32 %v826, %v937
          %v939 = vpop.f32.mrb[0].mxu0
          %940 = vmatprep.mubr.bf16.mxu0 0
          %941 = vmatmul.mubr.bf16.gmra.mrb[0].mxu0 %v864
          %v942 = vpop.f32.mrb[0].mxu0
          %v943 = vadd.f32 %v826, %v942
          %v944 = vpop.f32.mrb[0].mxu0
          %v945 = vpop.f32.mrb[0].mxu0
          %v946 = vadd.f32 %v826, %v945
          %v947 = vpop.f32.mrb[0].mxu0
          %948 = vmatprep.mubr.bf16.mxu0 0
          %949 = vmatmul.mubr.bf16.gmra.mrb[0].mxu0 %v865
          %v950 = vpop.f32.mrb[0].mxu0
          %v951 = vadd.f32 %v826, %v950
          %v952 = vpop.f32.mrb[0].mxu0
          %v953 = vpop.f32.mrb[0].mxu0
          %v954 = vadd.f32 %v826, %v953
          %v955 = vpop.f32.mrb[0].mxu0
          %956 = vmatprep.mubr.bf16.mxu0 0
          %957 = vmatmul.mubr.bf16.gmra.mrb[0].mxu0 %v866
          %v958 = vpop.f32.mrb[0].mxu0
          %v959 = vadd.f32 %v826, %v958
          %v960 = vpop.f32.mrb[0].mxu0
          %v961 = vpop.f32.mrb[0].mxu0
          %v962 = vadd.f32 %v826, %v961
          %v963 = vpop.f32.mrb[0].mxu0
          %964 = vmatprep.mubr.bf16.mxu0 0
          %965 = vmatmul.mubr.bf16.gmra.mrb[0].mxu0 %v867
          %v966 = vpop.f32.mrb[0].mxu0
          %v967 = vadd.f32 %v826, %v966
          %v968 = vpop.f32.mrb[0].mxu0
          %v969 = vpop.f32.mrb[0].mxu0
          %v970 = vadd.f32 %v826, %v969
          %v971 = vpop.f32.mrb[0].mxu0
          %972 = vdwg.mxu0
          %v973 = vmax.f32 %v911, 0.0
          %v974 = vmax.f32 %v914, 0.0
          %v975 = vmax.f32 %v919, 0.0
          %v976 = vmax.f32 %v922, 0.0
          %v977 = vmax.f32 %v927, 0.0
          %v978 = vmax.f32 %v930, 0.0
          %v979 = vmax.f32 %v935, 0.0
          %v980 = vmax.f32 %v938, 0.0
          %v981 = vmax.f32 %v943, 0.0
          %v982 = vmax.f32 %v946, 0.0
          %v983 = vmax.f32 %v951, 0.0
          %v984 = vmax.f32 %v954, 0.0
          %v985 = vmax.f32 %v959, 0.0
          %v986 = vmax.f32 %v962, 0.0
          %v987 = vmax.f32 %v967, 0.0
          %v988 = vmax.f32 %v970, 0.0
          %v989 = vpack.c.bf16 %v974, %v973
          %v990 = vpack.c.bf16 %v976, %v975
          %v991 = vpack.c.bf16 %v978, %v977
          %v992 = vpack.c.bf16 %v980, %v979
          %v993 = vpack.c.bf16 %v982, %v981
          %v994 = vpack.c.bf16 %v984, %v983
          %v995 = vpack.c.bf16 %v986, %v985
          %v996 = vpack.c.bf16 %v988, %v987
          %s997 = sshra.s32 %s367, 4
          %s998 = sand.u32 %s367, 15
          %s999 = smul.addr %s997, 8
          %s1000 = scalar_lea.vmem [#allocation3], %s999
          %1001 = vst [vmem:[%s1000] sm:$0xff] %v989
          %1002 = vst [vmem:[%s1000 + $0x8] sm:$0xff] %v990
          %1003 = vst [vmem:[%s1000 + $0x10] sm:$0xff] %v991
          %1004 = vst [vmem:[%s1000 + $0x18] sm:$0xff] %v992
          %1005 = vst [vmem:[%s1000 + $0x20] sm:$0xff] %v993
          %1006 = vst [vmem:[%s1000 + $0x28] sm:$0xff] %v994
          %1007 = vst [vmem:[%s1000 + $0x30] sm:$0xff] %v995
          %1008 = vst [vmem:[%s1000 + $0x38] sm:$0xff] %v996
        $region80: #{tpu_custom_call.1} parent=51 // pred_fallthru
          _
        %p1009 = scmp.eq.s32.totalorder %s28, 0
        %p1010 = pnand %p809, %p1009
        %p1011 = pneg %p1010
        // Predicated region
        $region81: #{tpu_custom_call.1} parent=51 // pred_check
          _
        $region82: #{tpu_custom_call.1} parent=51 // pred_check_branch
          %1013 = sbr.rel (%p1010) target = $region84
        $region83: #{tpu_custom_call.1} parent=51 // pred_region
          %v1014 = vld [vmem:[#allocation9] sm:$0xf]
          %v1015 = vld [vmem:[#allocation9 + $0x4] sm:$0xf]
          %v1016 = vld [vmem:[#allocation3] sm:$0xff]
          %v1017 = vld [vmem:[#allocation3 + $0x8] sm:$0xff]
          %v1018 = vld [vmem:[#allocation3 + $0x10] sm:$0xff]
          %v1019 = vld [vmem:[#allocation3 + $0x18] sm:$0xff]
          %v1020 = vld [vmem:[#allocation3 + $0x20] sm:$0xff]
          %v1021 = vld [vmem:[#allocation3 + $0x28] sm:$0xff]
          %v1022 = vld [vmem:[#allocation3 + $0x30] sm:$0xff]
          %v1023 = vld [vmem:[#allocation3 + $0x38] sm:$0xff]
          %v1026 = vunpack.c.l.b16 %v1014
          %v1027 = vunpack.c.l.b16 %v1015
          %v1028 = vpack.c.b16 %v1027, %v1026
          %1030 = vmatprep.subr.bf16.mxu0 0
          %1031 = vmatpush1.bf16.msra.mxu0 %v1016
          %1032 = vmatprep.subr.bf16.mxu0 0
          %1033 = vmatpush1.bf16.msra.mxu0 %v1017
          %1034 = vmatprep.subr.bf16.mxu0 0
          %1035 = vmatpush1.bf16.msra.mxu0 %v1018
          %1036 = vmatprep.subr.bf16.mxu0 0
          %1037 = vmatpush1.bf16.msra.mxu0 %v1019
          %1038 = vmatprep.subr.bf16.mxu0 0
          %1039 = vmatpush1.bf16.msra.mxu0 %v1020
          %1040 = vmatprep.subr.bf16.mxu0 0
          %1041 = vmatpush1.bf16.msra.mxu0 %v1021
          %1042 = vmatprep.subr.bf16.mxu0 0
          %1043 = vmatpush1.bf16.msra.mxu0 %v1022
          %1044 = vmatprep.subr.bf16.mxu0 0
          %1045 = vmatpush1.bf16.msra.mxu0 %v1023
          %1046 = vmatprep.subr.bf16.mxu0 0
          %1047 = vmatpush1.bf16.msra.mxu0 0
          %1048 = vmatprep.subr.bf16.mxu0 0
          %1049 = vmatpush1.bf16.msra.mxu0 0
          %1050 = vmatprep.subr.bf16.mxu0 0
          %1051 = vmatpush1.bf16.msra.mxu0 0
          %1052 = vmatprep.subr.bf16.mxu0 0
          %1053 = vmatpush1.bf16.msra.mxu0 0
          %1054 = vmatprep.subr.bf16.mxu0 0
          %1055 = vmatpush1.bf16.msra.mxu0 0
          %1056 = vmatprep.subr.bf16.mxu0 0
          %1057 = vmatpush1.bf16.msra.mxu0 0
          %1058 = vmatprep.subr.bf16.mxu0 0
          %1059 = vmatpush1.bf16.msra.mxu0 0
          %1060 = vmatprep.subr.bf16.mxu0 0
          %1061 = vmatpush1.bf16.msra.mxu0 0
          %1062 = vmatprep.mubr.bf16.mxu0 0
          %1063 = vmatmul.mubr.bf16.gmra.mrb[0].mxu0 %v1028
          %v1064 = vpop.f32.mrb[0].mxu0
          %v1065 = vadd.f32 0.0, %v1064
          %v1066 = vpop.f32.mrb[0].mxu0
          %v1067 = vpop.f32.mrb[0].mxu0
          %v1068 = vadd.f32 0.0, %v1067
          %v1069 = vpop.f32.mrb[0].mxu0
          %1070 = vdwg.mxu0
          %v1071 = vpack.c.bf16 %v1068, %v1065
          %v1072 = vld [vmem:[#allocation12] sm:$0xf]
          %v1073 = vld [vmem:[#allocation12 + $0x4] sm:$0xf]
          %v1074 = vld [vmem:[#allocation12 + $0x8] sm:$0xf]
          %v1075 = vld [vmem:[#allocation12 + $0xc] sm:$0xf]
          %v1076 = vld [vmem:[#allocation12 + $0x10] sm:$0xf]
          %v1077 = vld [vmem:[#allocation12 + $0x14] sm:$0xf]
          %v1078 = vld [vmem:[#allocation12 + $0x18] sm:$0xf]
          %v1079 = vld [vmem:[#allocation12 + $0x1c] sm:$0xf]
          %v1080 = vld [vmem:[#allocation12 + $0x20] sm:$0xf]
          %v1081 = vld [vmem:[#allocation12 + $0x24] sm:$0xf]
          %v1082 = vld [vmem:[#allocation12 + $0x28] sm:$0xf]
          %v1083 = vld [vmem:[#allocation12 + $0x2c] sm:$0xf]
          %v1084 = vld [vmem:[#allocation12 + $0x30] sm:$0xf]
          %v1085 = vld [vmem:[#allocation12 + $0x34] sm:$0xf]
          %v1086 = vld [vmem:[#allocation12 + $0x38] sm:$0xf]
          %v1087 = vld [vmem:[#allocation12 + $0x3c] sm:$0xf]
          %v1088 = vld [vmem:[%s7] sm:$0x1]
          %v1090 = vlaneseq
          %v1091 = vshrl.u32 %v1090, 7
          %v1092 = vsub.s32 0, %v1091
          %v1093 = vrot.slane %v1088, %v1092
          %v1111 = vunpack.c.l.b16 %v1072
          %v1112 = vunpack.c.l.b16 %v1073
          %v1113 = vunpack.c.l.b16 %v1074
          %v1114 = vunpack.c.l.b16 %v1075
          %v1115 = vunpack.c.l.b16 %v1076
          %v1116 = vunpack.c.l.b16 %v1077
          %v1117 = vunpack.c.l.b16 %v1078
          %v1118 = vunpack.c.l.b16 %v1079
          %v1119 = vunpack.c.l.b16 %v1080
          %v1120 = vunpack.c.l.b16 %v1081
          %v1121 = vunpack.c.l.b16 %v1082
          %v1122 = vunpack.c.l.b16 %v1083
          %v1123 = vunpack.c.l.b16 %v1084
          %v1124 = vunpack.c.l.b16 %v1085
          %v1125 = vunpack.c.l.b16 %v1086
          %v1126 = vunpack.c.l.b16 %v1087
          %v1127 = vpack.c.b16 %v1112, %v1111
          %v1128 = vpack.c.b16 %v1114, %v1113
          %v1129 = vpack.c.b16 %v1116, %v1115
          %v1130 = vpack.c.b16 %v1118, %v1117
          %v1131 = vpack.c.b16 %v1120, %v1119
          %v1132 = vpack.c.b16 %v1122, %v1121
          %v1133 = vpack.c.b16 %v1124, %v1123
          %v1134 = vpack.c.b16 %v1126, %v1125
          %1143 = vmatprep.subr.bf16.mxu0 0
          %1144 = vmatpush1.bf16.msra.mxu0 %v1127
          %1145 = vmatprep.subr.bf16.mxu0 0
          %1146 = vmatpush1.bf16.msra.mxu0 %v1128
          %1147 = vmatprep.subr.bf16.mxu0 0
          %1148 = vmatpush1.bf16.msra.mxu0 %v1129
          %1149 = vmatprep.subr.bf16.mxu0 0
          %1150 = vmatpush1.bf16.msra.mxu0 %v1130
          %1151 = vmatprep.subr.bf16.mxu0 0
          %1152 = vmatpush1.bf16.msra.mxu0 %v1131
          %1153 = vmatprep.subr.bf16.mxu0 0
          %1154 = vmatpush1.bf16.msra.mxu0 %v1132
          %1155 = vmatprep.subr.bf16.mxu0 0
          %1156 = vmatpush1.bf16.msra.mxu0 %v1133
          %1157 = vmatprep.subr.bf16.mxu0 0
          %1158 = vmatpush1.bf16.msra.mxu0 %v1134
          %1159 = vmatprep.subr.bf16.mxu0 0
          %1160 = vmatpush1.bf16.msra.mxu0 0
          %1161 = vmatprep.subr.bf16.mxu0 0
          %1162 = vmatpush1.bf16.msra.mxu0 0
          %1163 = vmatprep.subr.bf16.mxu0 0
          %1164 = vmatpush1.bf16.msra.mxu0 0
          %1165 = vmatprep.subr.bf16.mxu0 0
          %1166 = vmatpush1.bf16.msra.mxu0 0
          %1167 = vmatprep.subr.bf16.mxu0 0
          %1168 = vmatpush1.bf16.msra.mxu0 0
          %1169 = vmatprep.subr.bf16.mxu0 0
          %1170 = vmatpush1.bf16.msra.mxu0 0
          %1171 = vmatprep.subr.bf16.mxu0 0
          %1172 = vmatpush1.bf16.msra.mxu0 0
          %1173 = vmatprep.subr.bf16.mxu0 0
          %1174 = vmatpush1.bf16.msra.mxu0 0
          %1175 = vmatprep.mubr.bf16.mxu0 0
          %1176 = vmatmul.mubr.bf16.gmra.mrb[0].mxu0 %v1071
          %v1177 = vpop.f32.mrb[0].mxu0
          %v1178 = vadd.f32 %v1093, %v1177
          %v1179 = vpop.f32.mrb[0].mxu0
          %v1180 = vpop.f32.mrb[0].mxu0
          %v1181 = vadd.f32 %v1093, %v1180
          %v1182 = vpop.f32.mrb[0].mxu0
          %1183 = vdwg.mxu0
          %1184 = vst [vmem:[#allocation13] sm:$0xff] %v1178
          %1185 = vst [vmem:[#allocation13 + $0x8] sm:$0xff] %v1181
        $region84: #{tpu_custom_call.1} parent=51 // pred_fallthru
          _
        // Predicated region
        $region85: #{tpu_custom_call.1} parent=51 // pred_check
          %p1186 = pneg %p221
        $region86: #{tpu_custom_call.1} parent=51 // pred_check_branch
          %1188 = sbr.rel (%p1186) target = $region88
        $region87: #{tpu_custom_call.1} parent=51 // pred_region
          %s1190 = ssub.s32 256, 256
          %1191 = vsyncadd [#allocation6], %s1190
          %s1192 = sshll.u32 [#allocation13], 4
          %s1193 = int_to_ptr.vmem [resolvable:$true] %s1192
          %1198 = dma.vmem_to_hbm [thread:$0]  %s1193, 256, %s8, [#allocation6], 128, 128, 8
        $region88: #{tpu_custom_call.1} parent=51 // pred_fallthru
          _
        // Predicated region
        $region89: #{tpu_custom_call.1} parent=51 // pred_check
          %p1199 = pneg %p221
        $region90: #{tpu_custom_call.1} parent=51 // pred_check_branch
          %1201 = sbr.rel (%p1199) target = $region92
        $region91: #{tpu_custom_call.1} parent=51 // pred_region
          %1202 = dma.done [#allocation6], 256
        $region92: #{tpu_custom_call.1} parent=51 // pred_fallthru
          _
      $region52: #{tpu_custom_call.1} parent=5 // pred_fallthru
        _
      %p1203 = scmp.le.s32.totalorder 2, %s18
      // Predicated region
      $region93: #{tpu_custom_call.1} parent=5 // pred_check
        %p1204 = pneg %p1203
      $region94: #{tpu_custom_call.1} parent=5 // pred_check_branch
        %1206 = sbr.rel (%p1204) target = $region96
      $region95: #{tpu_custom_call.1} parent=5 // pred_region
        %s1207 = ssub.s32 %s18, 2
      $region96: #{tpu_custom_call.1} parent=5 // pred_fallthru
        _
    $region6: #{tpu_custom_call.1} parent=1 // loop_footer
      %s22 = sadd.s32 1, %s18
    $region7: #{tpu_custom_call.1} parent=1 // loop_footer_branch
      %17 = sbr.rel target = $region3
    $region8: #{tpu_custom_call.1} parent=1 // loop_exit
      _
    %1208 = vsyncpa [#allocation5], 1
    %s1209 = scalar_lea.sflag [#allocation5], 1
    %1210 = vsyncpa %s1209, 1
    %1211 = vsyncpa [#allocation8], 1
    %1212 = vsyncpa [#allocation11], 1
    %1213 = vsyncpa [#allocation6], 1
    %s1214 = scalar_lea.sflag [#allocation6], 1
    %1215 = vsyncpa %s1214, 1

</llo_original>
